<compile_context>
chip_gen: v7x
topology: tpu7x:2x2x1
jax: 0.10.0
libtpu: 0.0.40
codegen_flags: <defaults>
</compile_context>

<pallas_src>
import jax
import jax.numpy as jnp
from jax.experimental import pallas as pl
from jax.experimental.pallas import tpu as pltpu


def _round_up(x, m):
    return ((x + m - 1) // m) * m


def _pick_block(dim, target, unit=128, pref=256):
    """Block size for `dim`: the whole (padded) dim if it fits `target`,
    otherwise `target` snapped down to a 256-multiple (v6e/v7x MXU is 2x256x256)."""
    full = _round_up(dim, unit)
    if full <= target:
        return full
    t = min(target, full)
    if t > pref and t % pref:
        t = (t // pref) * pref
    return t


def _pick_tn(n, tn_target):
    """Output-dim block. If the whole padded N fits one block but is >= 256, split
    it so the 'parallel' output grid axis has >= 2 blocks (feeds both v7x
    TensorCores; no-op on single-TC v5e/v6e)."""
    tn = _pick_block(n, tn_target)
    n_pad = _round_up(n, tn)
    if n_pad // tn == 1 and n_pad >= 256:
        half = n_pad // 2
        tn = half if half % 128 == 0 else 128
    return tn


# ----------------------------------------------------------------------------- kernels


def _linear_kernel_acc(x_ref, w_ref, b_ref, o_ref, acc_ref):
    """One (bm, tn) output tile, reducing over the K grid axis (axis 2).

    x_ref: (bm, tk)  w_ref: (tk, tn)  b_ref: (1, tn) f32  o_ref: (bm, tn)
    acc_ref: f32 VMEM scratch (bm, tn), persists across the K axis.
    """
    k = pl.program_id(2)

    @pl.when(k == 0)
    def _():
        acc_ref[...] = jnp.zeros_like(acc_ref)

    # Weight is pre-transposed to (K, N) in the wrapper -> canonical MXU matmul,
    # no in-kernel transpose; f32 accumulation regardless of input dtype.
    acc_ref[...] += jnp.dot(x_ref[...], w_ref[...],
                            preferred_element_type=jnp.float32)

    @pl.when(k == pl.num_programs(2) - 1)
    def _():
        o_ref[...] = (acc_ref[...] + b_ref[...]).astype(o_ref.dtype)


def _linear_kernel_single_k(x_ref, w_ref, b_ref, o_ref):
    """Single K step: write directly, skip the accumulator round trip."""
    o_ref[...] = (jnp.dot(x_ref[...], w_ref[...],
                          preferred_element_type=jnp.float32)
                  + b_ref[...]).astype(o_ref.dtype)


# ----------------------------------------------------------------------------- pallas wrapper


def _linear_pallas(x_p, w_t, b2d, out_dtype, *, bm, tn, tk):
    """y_pad = x_pad @ w_t + b on padded, tile-aligned operands.

    x_p: (B_pad, K_pad) compute dtype; w_t: (K_pad, N_pad) compute dtype;
    b2d: (1, N_pad) f32.
    """
    B_pad, K_pad = x_p.shape
    K_pad2, N_pad = w_t.shape
    assert K_pad == K_pad2

    grid = (B_pad // bm, N_pad // tn, K_pad // tk)
    single_k = grid[2] == 1

    x_it = x_p.dtype.itemsize
    w_it = w_t.dtype.itemsize
    o_it = jnp.dtype(out_dtype).itemsize

    # Double-buffered in/out tiles + (optional) f32 accumulator scratch.
    tile_bytes = bm * tk * x_it + tk * tn * w_it + tn * 4 + bm * tn * o_it
    vmem_needed = 2 * tile_bytes + (0 if single_k else bm * tn * 4)
    # v5e's scoped-VMEM default is 16 MiB; be explicit. Cap at 64 MiB (v7x physical).
    vmem_limit = int(min(64 << 20, max(vmem_needed + (2 << 20), 16 << 20)))

    flops = 2 * B_pad * N_pad * K_pad
    bytes_accessed = (x_p.size * x_it * grid[1]        # x re-read per output-col block
                      + w_t.size * w_it * grid[0]      # W re-read per batch block
                      + b2d.size * 4 * grid[0]
                      + B_pad * N_pad * o_it)

    kernel = _linear_kernel_single_k if single_k else _linear_kernel_acc
    scratch = [] if single_k else [pltpu.VMEM((bm, tn), jnp.float32)]

    return pl.pallas_call(
        kernel,
        out_shape=jax.ShapeDtypeStruct((B_pad, N_pad), out_dtype),
        grid_spec=pltpu.PrefetchScalarGridSpec(
            num_scalar_prefetch=0,
            grid=grid,
            in_specs=[
                pl.BlockSpec((bm, tk), lambda i, j, k: (i, k)),   # x tile
                pl.BlockSpec((tk, tn), lambda i, j, k: (k, j)),   # W^T tile
                pl.BlockSpec((1, tn), lambda i, j, k: (0, j)),    # bias tile
            ],
            out_specs=pl.BlockSpec((bm, tn), lambda i, j, k: (i, j)),
            scratch_shapes=scratch,
        ),
        compiler_params=pltpu.CompilerParams(
            dimension_semantics=("parallel", "parallel", "arbitrary"),
            vmem_limit_bytes=vmem_limit),
        cost_estimate=pl.CostEstimate(
            flops=flops, bytes_accessed=int(bytes_accessed), transcendentals=0),
    )(x_p, w_t, b2d)


# ----------------------------------------------------------------------------- prep + forward


def prepare_weight_bias(weight_eff, bias, *, tn, tk, compute_dtype=jnp.bfloat16):
    """Pad/cast/transpose the effective weight ONCE (off the forward hot path).

    weight_eff: (N, K) effective weight (W or W + W_inj).
    Returns (w_t, b2d): w_t is (K_pad, N_pad) in compute_dtype (MXU-native layout),
    b2d is (1, N_pad) f32.
    """
    N, K = weight_eff.shape
    N_pad = _round_up(N, tn)
    K_pad = _round_up(K, tk)
    w = weight_eff.astype(compute_dtype)
    if (N_pad, K_pad) != (N, K):
        w = jnp.pad(w, ((0, N_pad - N), (0, K_pad - K)))
    w_t = jnp.transpose(w)                       # one-time (N,K)->(K,N) transpose
    b = bias.astype(jnp.float32)
    if N_pad != N:
        b = jnp.pad(b, (0, N_pad - N))
    return w_t, b.reshape(1, N_pad)


def linear_forward_prepared(x, w_t, b2d, out_features, *, tn, tk,
                            bm_target=512, compute_dtype=jnp.bfloat16):
    """y = x @ W_eff^T + b with a pre-prepared (padded/cast/transposed) weight."""
    B, K = x.shape
    K_pad, N_pad = w_t.shape
    assert K <= K_pad and N_pad % tn == 0 and K_pad % tk == 0
    out_dtype = x.dtype

    # Batch tile: multiple of 16 rows (bf16 sublane packing); bigger bm means the
    # weight is re-streamed fewer times (weight HBM traffic ~ ceil(B/bm) * N * K).
    bm = min(bm_target, _round_up(B, 16))
    B_pad = _round_up(B, bm)

    x_p = x.astype(compute_dtype)
    if (B_pad, K_pad) != (B, K):
        x_p = jnp.pad(x_p, ((0, B_pad - B), (0, K_pad - K)))

    y_p = _linear_pallas(x_p, w_t, b2d, out_dtype, bm=bm, tn=tn, tk=tk)
    return y_p[:B, :out_features]


def linear_injected(x, weight, weight_inject, bias, *, enabled=True,
                    compute_dtype=jnp.bfloat16, bm_target=512,
                    tn_target=512, tk_target=1024):
    """One-off functional API: y = x @ (W + W_inj)^T + b (W_inj ignored if disabled).

    Note: this folds/pads the weight per call; the class below caches that work.
    """
    N, K = weight.shape
    assert x.shape[1] == K, "x feature dim must match weight's in_features"
    tn = _pick_tn(N, tn_target)
    tk = _pick_block(K, tk_target)
    w_eff = weight + weight_inject if enabled else weight
    w_t, b2d = prepare_weight_bias(w_eff, bias, tn=tn, tk=tk,
                                   compute_dtype=compute_dtype)
    return linear_forward_prepared(x, w_t, b2d, N, tn=tn, tk=tk,
                                   bm_target=bm_target,
                                   compute_dtype=compute_dtype)


# ----------------------------------------------------------------------------- module


class LinearParameterInjector:
    """JAX/Pallas equivalent of Linear_ParameterInjector (forward pass)."""

    def __init__(self, weight, bias, noise_norm=0.1, noise_pattern="prop",
                 noise_norm_ex=1.5, weight_init=None,
                 compute_dtype=jnp.bfloat16, bm_target=512,
                 tn_target=512, tk_target=1024):
        self.weight_original = weight          # (out_features, in_features)
        self.bias_original = bias              # (out_features,)
        self.weight_init = weight_init
        self.noise_norm = noise_norm
        self.noise_pattern = noise_pattern
        self.noise_norm_ex = noise_norm_ex
        self.weight_inject = jnp.zeros_like(weight)
        self.enabled = False

        self.compute_dtype = compute_dtype
        self.bm_target = bm_target
        N, K = weight.shape
        self._tn = _pick_tn(N, tn_target)
        self._tk = _pick_block(K, tk_target)
        # Cached folded/padded/cast/transposed effective weight, keyed by `enabled`.
        # The disabled entry never changes; the enabled entry is invalidated
        # whenever weight_inject changes (sample()).
        self._cache = {}

    # --- ParameterInjector API ------------------------------------------------
    def get_state(self):
        return {"noise_norm": self.noise_norm,
                "noise_pattern": self.noise_pattern,
                "noise_norm_ex": self.noise_norm_ex}

    def set_norm(self, noise_norm, noise_pattern=None, noise_norm_ex=None):
        if noise_norm is not None:
            self.noise_norm = noise_norm
        if noise_pattern is not None:
            self.noise_pattern = noise_pattern
        if noise_norm_ex is not None:
            self.noise_norm_ex = noise_norm_ex

    def enable(self):
        self.enabled = True

    def disable(self):
        self.enabled = False

    def sample(self, key):
        w = self.weight_original
        noise = jax.random.normal(key, w.shape, dtype=w.dtype)
        if self.noise_pattern == "prop":
            self.weight_inject = self.noise_norm * noise * jnp.abs(w)
        elif self.noise_pattern == "indep":
            self.weight_inject = self.noise_norm * noise
        elif self.noise_pattern == "inv":
            self.weight_inject = self.noise_norm * noise * w
        elif self.noise_pattern == "subtract":
            self.weight_inject = (self.noise_norm
                                  - self.noise_norm * self.noise_norm_ex * jnp.abs(w)) * noise
        elif self.noise_pattern == "prop-deterministic":
            if self.weight_init is not None:
                self.weight_inject = self.noise_norm * (w - self.weight_init)
            else:
                self.weight_inject = self.noise_norm * w
        self._cache.pop(True, None)    # invalidate cached enabled weight

    # --- forward ----------------------------------------------------------------
    def _prepared(self):
        key = bool(self.enabled)
        if key not in self._cache:
            w_eff = (self.weight_original + self.weight_inject) if key \
                else self.weight_original
            self._cache[key] = prepare_weight_bias(
                w_eff, self.bias_original, tn=self._tn, tk=self._tk,
                compute_dtype=self.compute_dtype)
        return self._cache[key]

    def __call__(self, x):
        w_t, b2d = self._prepared()
        return linear_forward_prepared(
            x, w_t, b2d, self.weight_original.shape[0],
            tn=self._tn, tk=self._tk, bm_target=self.bm_target,
            compute_dtype=self.compute_dtype)


# ----------------------------------------------------------------------------- tests


if __name__ == "__main__":
    key = jax.random.PRNGKey(0)
    k_x, k_w, k_b, k_noise, k_big = jax.random.split(key, 5)

    batch, in_features, out_features = 8, 32, 32
    x = jax.random.normal(k_x, (batch, in_features), dtype=jnp.float32)
    weight = jax.random.normal(k_w, (out_features, in_features), dtype=jnp.float32) * 0.1
    bias = jax.random.normal(k_b, (out_features,), dtype=jnp.float32) * 0.1

    ref_dis = x @ weight.T + bias

    # Exactness check: f32 compute path, disabled (plain linear).
    y_f32 = jax.block_until_ready(
        linear_injected(x, weight, jnp.zeros_like(weight), bias, enabled=False,
                        compute_dtype=jnp.float32))
    assert y_f32.shape == (batch, out_features)
    assert jnp.allclose(y_f32, ref_dis, atol=1e-5, rtol=1e-5)

    # Class path: cached, bf16-compute, f32-accumulate.
    inj = LinearParameterInjector(weight, bias, noise_norm=0.1, noise_pattern="prop")
    y_dis = jax.block_until_ready(inj(x))
    assert jnp.allclose(y_dis, ref_dis, atol=3e-2, rtol=3e-2)

    inj.sample(k_noise)
    inj.enable()
    y_en = jax.block_until_ready(inj(x))
    ref_en = x @ (weight + inj.weight_inject).T + bias
    assert jnp.allclose(y_en, ref_en, atol=3e-2, rtol=3e-2)

    # Cached-weight path must be deterministic across calls.
    y_en2 = jax.block_until_ready(inj(x))
    assert jnp.allclose(y_en, y_en2)

    # Multi-tile, non-aligned shapes: exercise the K-reduction accumulator kernel
    # (f32-exact path, forced small tiles -> grid (2, 3, 3)).
    B2, K2, N2 = 130, 300, 384
    kx2, kw2, kb2, kn2 = jax.random.split(k_big, 4)
    x2 = jax.random.normal(kx2, (B2, K2), dtype=jnp.float32)
    w2 = jax.random.normal(kw2, (N2, K2), dtype=jnp.float32) * 0.05
    b2 = jax.random.normal(kb2, (N2,), dtype=jnp.float32) * 0.05
    wi2 = 0.1 * jax.random.normal(kn2, (N2, K2), dtype=jnp.float32) * jnp.abs(w2)
    ref2 = x2 @ (w2 + wi2).T + b2

    y2 = jax.block_until_ready(
        linear_injected(x2, w2, wi2, b2, enabled=True, compute_dtype=jnp.float32,
                        bm_target=128, tn_target=128, tk_target=128))
    assert jnp.allclose(y2, ref2, atol=1e-4, rtol=1e-4)

    # Same shapes through the default big-tile bf16 path (single-K fast kernel,
    # output axis split into >=2 parallel blocks).
    y3 = jax.block_until_ready(linear_injected(x2, w2, wi2, b2, enabled=True))
    assert jnp.allclose(y3, ref2, atol=5e-2, rtol=5e-2)

    print("KERNEL_OK")
</pallas_src>

<mosaic_0001>
module attributes {stable_mosaic.version = 11 : i64} {
  func.func @_linear_kernel_single_k(%arg0: i32, %arg1: i32, %arg2: i32, %arg3: memref<16x128xf32, #tpu.memory_space<vmem>>, %arg4: memref<128x128xf32, #tpu.memory_space<vmem>>, %arg5: memref<1x128xf32, #tpu.memory_space<vmem>>, %arg6: memref<16x128xf32, #tpu.memory_space<vmem>>) attributes {dimension_semantics = [#tpu.dimension_semantics<parallel>, #tpu.dimension_semantics<parallel>, #tpu.dimension_semantics<arbitrary>], iteration_bounds = array<i64: 1, 1, 1>, scalar_prefetch = 0 : i64, scratch_operands = 0 : i64, tpu.core_type = #tpu.core_type<tc>, window_params = [{transform_indices = @transform_0, window_bounds = array<i64: 16, 128>}, {transform_indices = @transform_1, window_bounds = array<i64: 128, 128>}, {transform_indices = @transform_2, window_bounds = array<i64: 1, 128>}, {transform_indices = @transform_3, window_bounds = array<i64: 16, 128>}]} {
    %c0 = arith.constant 0 : index
    %c0_0 = arith.constant 0 : index
    %0 = vector.load %arg3[%c0, %c0_0] : memref<16x128xf32, #tpu.memory_space<vmem>>, vector<16x128xf32>
    %c0_1 = arith.constant 0 : index
    %c0_2 = arith.constant 0 : index
    %1 = vector.load %arg4[%c0_1, %c0_2] : memref<128x128xf32, #tpu.memory_space<vmem>>, vector<128x128xf32>
    %cst = arith.constant dense<0.000000e+00> : vector<16x128xf32>
    %2 = tpu.matmul %0, %1, %cst {dimension_numbers = #tpu.dot_dimension_numbers<[1], [0], [0], [1], [0, 0, 1, 1], [], []>} : vector<16x128xf32>, vector<128x128xf32>, vector<16x128xf32> -> vector<16x128xf32>
    %c0_3 = arith.constant 0 : index
    %c0_4 = arith.constant 0 : index
    %3 = vector.load %arg5[%c0_3, %c0_4] : memref<1x128xf32, #tpu.memory_space<vmem>>, vector<1x128xf32>
    %4 = vector.broadcast %3 : vector<1x128xf32> to vector<16x128xf32>
    %5 = arith.addf %2, %4 : vector<16x128xf32>
    %c0_5 = arith.constant 0 : index
    %c0_6 = arith.constant 0 : index
    %6 = vector.load %arg6[%c0_5, %c0_6] : memref<16x128xf32, #tpu.memory_space<vmem>>, vector<16x128xf32>
    tpu.vector_store %arg6[%c0_5, %c0_6], %5 {strides = array<i32>} : memref<16x128xf32, #tpu.memory_space<vmem>>, vector<16x128xf32>,
    return
  }
  func.func @transform_0(%arg0: i32, %arg1: i32, %arg2: i32) -> (i32, i32) {
    %c0_i32 = arith.constant 0 : i32
    return %arg0, %arg2 : i32, i32
  }
  func.func @transform_1(%arg0: i32, %arg1: i32, %arg2: i32) -> (i32, i32) {
    %c0_i32 = arith.constant 0 : i32
    return %arg2, %arg1 : i32, i32
  }
  func.func @transform_2(%arg0: i32, %arg1: i32, %arg2: i32) -> (i32, i32) {
    %c0_i32 = arith.constant 0 : i32
    %c0_i32_0 = arith.constant 0 : i32
    return %c0_i32, %arg1 : i32, i32
  }
  func.func @transform_3(%arg0: i32, %arg1: i32, %arg2: i32) -> (i32, i32) {
    %c0_i32 = arith.constant 0 : i32
    return %arg0, %arg1 : i32, i32
  }
}

</mosaic_0001>

<llo_original>
// kernel: tpu_custom_call.1
$region0: #{tpu_custom_call.1}
  #allocation0 [shape = 'u32[]', space=smem, size = 0x4, offset = 0x4, fixed_abs, tag = 'smem constant byte address 0x4 - core index']
  #allocation1 [shape = 'u32[144,128]{1,0:T(1,128)}', space=vmem, size = 0x12000, scoped, tag = 'internal scratch']
  %s0 = inlined_call_operand.hbm [shape: f32[16,128], index: 0, kind: input, shape index: {}]
  %s1 = inlined_call_operand.hbm [shape: f32[128,128], index: 1, kind: input, shape index: {}]
  %s2 = inlined_call_operand.vmem [shape: f32[1,128], index: 2, kind: input, shape index: {}]
  %s3 = inlined_call_operand.hbm [shape: f32[16,128], index: 3, kind: output, shape index: {}]
  %s4 = sld [smem:[#allocation0]]
  $region30: #{tpu_custom_call.1} parent=0
    _
  %s6 = ssub.s32 1, %s4
  %s7 = scalar_select 0, %s6, %s4
  $region1: #{tpu_custom_call.1} parent=0
    #allocation2 [shape = 'u8[8192]{0}', space=vmem, size = 0x2000, scoped, tag = 'input window, operand 0, single buffered']
    #allocation3 [shape = 's32[1]{0}', space=sflag, size = 0x4, scoped, tag = 'scoped memory for tpu_custom_call.1']
    #allocation4 [shape = 's32[1]{0}', space=sflag, size = 0x4, scoped, tag = 'scoped memory for tpu_custom_call.1']
    #allocation5 [shape = 'u8[65536]{0}', space=vmem, size = 0x10000, scoped, tag = 'input window, operand 1, single buffered']
    #allocation6 [shape = 's32[1]{0}', space=sflag, size = 0x4, scoped, tag = 'scoped memory for tpu_custom_call.1']
    #allocation7 [shape = 'u8[8192]{0}', space=vmem, size = 0x2000, scoped, tag = 'output window, operand 0, single buffered']
    %8 = vsyncpa [#allocation3], 0
    %9 = vsyncpa [#allocation6], 0
    %10 = vsyncpa [#allocation4], 0
    // Predicated region
    $region2: #{tpu_custom_call.1} parent=1 // pred_check
      _
    $region3: #{tpu_custom_call.1} parent=1 // pred_check_branch
      %12 = sbr.rel (0) target = $region5
    $region4: #{tpu_custom_call.1} parent=1 // pred_region
      %s14 = ssub.s32 256, 256
      %15 = vsyncadd [#allocation3], %s14
      %s16 = sshll.u32 [#allocation2], 4
      %s17 = int_to_ptr.vmem [resolvable:$true] %s16
      %22 = dma.hbm_to_vmem [thread:$0]  %s0, 256, %s17, [#allocation3], 128, 128, 8
    $region5: #{tpu_custom_call.1} parent=1 // pred_fallthru
      _
    // Predicated region
    $region6: #{tpu_custom_call.1} parent=1 // pred_check
      _
    $region7: #{tpu_custom_call.1} parent=1 // pred_check_branch
      %24 = sbr.rel (0) target = $region9
    $region8: #{tpu_custom_call.1} parent=1 // pred_region
      %s26 = ssub.s32 2048, 2048
      %27 = vsyncadd [#allocation6], %s26
      %s28 = sshll.u32 [#allocation5], 4
      %s29 = int_to_ptr.vmem [resolvable:$true] %s28
      %34 = dma.hbm_to_vmem [thread:$0]  %s1, 2048, %s29, [#allocation6], 128, 128, 8
    $region9: #{tpu_custom_call.1} parent=1 // pred_fallthru
      _
    // Predicated region
    $region10: #{tpu_custom_call.1} parent=1 // pred_check
      _
    $region11: #{tpu_custom_call.1} parent=1 // pred_check_branch
      %36 = sbr.rel (0) target = $region13
    $region12: #{tpu_custom_call.1} parent=1 // pred_region
      _
    $region13: #{tpu_custom_call.1} parent=1 // pred_fallthru
      _
    // Predicated region
    $region14: #{tpu_custom_call.1} parent=1 // pred_check
      _
    $region15: #{tpu_custom_call.1} parent=1 // pred_check_branch
      %38 = sbr.rel (0) target = $region17
    $region16: #{tpu_custom_call.1} parent=1 // pred_region
      %39 = dma.done [#allocation3], 256
    $region17: #{tpu_custom_call.1} parent=1 // pred_fallthru
      _
    // Predicated region
    $region18: #{tpu_custom_call.1} parent=1 // pred_check
      _
    $region19: #{tpu_custom_call.1} parent=1 // pred_check_branch
      %41 = sbr.rel (0) target = $region21
    $region20: #{tpu_custom_call.1} parent=1 // pred_region
      %42 = dma.done [#allocation6], 2048
    $region21: #{tpu_custom_call.1} parent=1 // pred_fallthru
      _
    %v43 = vld [vmem:[#allocation2] sm:$0xff]
    %v44 = vld [vmem:[#allocation2 + $0x8] sm:$0xff]
    %v45 = vld [vmem:[#allocation5] sm:$0xff]
    %v46 = vld [vmem:[#allocation5 + $0x8] sm:$0xff]
    %v47 = vld [vmem:[#allocation5 + $0x10] sm:$0xff]
    %v48 = vld [vmem:[#allocation5 + $0x18] sm:$0xff]
    %v49 = vld [vmem:[#allocation5 + $0x20] sm:$0xff]
    %v50 = vld [vmem:[#allocation5 + $0x28] sm:$0xff]
    %v51 = vld [vmem:[#allocation5 + $0x30] sm:$0xff]
    %v52 = vld [vmem:[#allocation5 + $0x38] sm:$0xff]
    %v53 = vld [vmem:[#allocation5 + $0x40] sm:$0xff]
    %v54 = vld [vmem:[#allocation5 + $0x48] sm:$0xff]
    %v55 = vld [vmem:[#allocation5 + $0x50] sm:$0xff]
    %v56 = vld [vmem:[#allocation5 + $0x58] sm:$0xff]
    %v57 = vld [vmem:[#allocation5 + $0x60] sm:$0xff]
    %v58 = vld [vmem:[#allocation5 + $0x68] sm:$0xff]
    %v59 = vld [vmem:[#allocation5 + $0x70] sm:$0xff]
    %v60 = vld [vmem:[#allocation5 + $0x78] sm:$0xff]
    %v61 = vld [vmem:[%s2] sm:$0x1]
    %v63 = vlaneseq
    %v64 = vshrl.u32 %v63, 7
    %v65 = vsub.s32 0, %v64
    %v66 = vrot.slane %v61, %v65
    %68 = vmatprep.subr.mxu0 0.0
    %69 = vmatpush1.msra.mxu0 %v45
    %70 = vmatprep.subr.mxu0 0.0
    %71 = vmatpush1.msra.mxu0 %v46
    %72 = vmatprep.subr.mxu0 0.0
    %73 = vmatpush1.msra.mxu0 %v47
    %74 = vmatprep.subr.mxu0 0.0
    %75 = vmatpush1.msra.mxu0 %v48
    %76 = vmatprep.subr.mxu0 0.0
    %77 = vmatpush1.msra.mxu0 %v49
    %78 = vmatprep.subr.mxu0 0.0
    %79 = vmatpush1.msra.mxu0 %v50
    %80 = vmatprep.subr.mxu0 0.0
    %81 = vmatpush1.msra.mxu0 %v51
    %82 = vmatprep.subr.mxu0 0.0
    %83 = vmatpush1.msra.mxu0 %v52
    %84 = vmatprep.subr.mxu0 0.0
    %85 = vmatpush1.msra.mxu0 %v53
    %86 = vmatprep.subr.mxu0 0.0
    %87 = vmatpush1.msra.mxu0 %v54
    %88 = vmatprep.subr.mxu0 0.0
    %89 = vmatpush1.msra.mxu0 %v55
    %90 = vmatprep.subr.mxu0 0.0
    %91 = vmatpush1.msra.mxu0 %v56
    %92 = vmatprep.subr.mxu0 0.0
    %93 = vmatpush1.msra.mxu0 %v57
    %94 = vmatprep.subr.mxu0 0.0
    %95 = vmatpush1.msra.mxu0 %v58
    %96 = vmatprep.subr.mxu0 0.0
    %97 = vmatpush1.msra.mxu0 %v59
    %98 = vmatprep.subr.mxu0 0.0
    %99 = vmatpush1.msra.mxu0 %v60
    %100 = vmatprep.subr.mxu0 0.0
    %101 = vmatpush1.msra.mxu0 0.0
    %102 = vmatprep.subr.mxu0 0.0
    %103 = vmatpush1.msra.mxu0 0.0
    %104 = vmatprep.subr.mxu0 0.0
    %105 = vmatpush1.msra.mxu0 0.0
    %106 = vmatprep.subr.mxu0 0.0
    %107 = vmatpush1.msra.mxu0 0.0
    %108 = vmatprep.subr.mxu0 0.0
    %109 = vmatpush1.msra.mxu0 0.0
    %110 = vmatprep.subr.mxu0 0.0
    %111 = vmatpush1.msra.mxu0 0.0
    %112 = vmatprep.subr.mxu0 0.0
    %113 = vmatpush1.msra.mxu0 0.0
    %114 = vmatprep.subr.mxu0 0.0
    %115 = vmatpush1.msra.mxu0 0.0
    %116 = vmatprep.subr.mxu0 0.0
    %117 = vmatpush1.msra.mxu0 0.0
    %118 = vmatprep.subr.mxu0 0.0
    %119 = vmatpush1.msra.mxu0 0.0
    %120 = vmatprep.subr.mxu0 0.0
    %121 = vmatpush1.msra.mxu0 0.0
    %122 = vmatprep.subr.mxu0 0.0
    %123 = vmatpush1.msra.mxu0 0.0
    %124 = vmatprep.subr.mxu0 0.0
    %125 = vmatpush1.msra.mxu0 0.0
    %126 = vmatprep.subr.mxu0 0.0
    %127 = vmatpush1.msra.mxu0 0.0
    %128 = vmatprep.subr.mxu0 0.0
    %129 = vmatpush1.msra.mxu0 0.0
    %130 = vmatprep.subr.mxu0 0.0
    %131 = vmatpush1.msra.mxu0 0.0
    %132 = vmatprep.mubr.f32.mxu0 0.0
    %133 = vmatmul.mubr.f32.gmra.mrb[0].mxu0 %v43
    %v134 = vpop.f32.mrb[0].mxu0
    %v135 = vadd.f32 %v66, %v134
    %v136 = vpop.f32.mrb[0].mxu0
    %137 = vmatprep.mubr.f32.mxu0 0.0
    %138 = vmatmul.mubr.f32.gmra.mrb[0].mxu0 %v44
    %v139 = vpop.f32.mrb[0].mxu0
    %v140 = vadd.f32 %v66, %v139
    %v141 = vpop.f32.mrb[0].mxu0
    %142 = vdwg.mxu0
    %143 = vst [vmem:[#allocation7] sm:$0xff] %v135
    %144 = vst [vmem:[#allocation7 + $0x8] sm:$0xff] %v140
    // Predicated region
    $region22: #{tpu_custom_call.1} parent=1 // pred_check
      _
    $region23: #{tpu_custom_call.1} parent=1 // pred_check_branch
      %146 = sbr.rel (0) target = $region25
    $region24: #{tpu_custom_call.1} parent=1 // pred_region
      %s148 = ssub.s32 256, 256
      %149 = vsyncadd [#allocation4], %s148
      %s150 = sshll.u32 [#allocation7], 4
      %s151 = int_to_ptr.vmem [resolvable:$true] %s150
      %156 = dma.vmem_to_hbm [thread:$0]  %s151, 256, %s3, [#allocation4], 128, 128, 8
    $region25: #{tpu_custom_call.1} parent=1 // pred_fallthru
      _
    // Predicated region
    $region26: #{tpu_custom_call.1} parent=1 // pred_check
      _
    $region27: #{tpu_custom_call.1} parent=1 // pred_check_branch
      %158 = sbr.rel (0) target = $region29
    $region28: #{tpu_custom_call.1} parent=1 // pred_region
      %159 = dma.done [#allocation4], 256
    $region29: #{tpu_custom_call.1} parent=1 // pred_fallthru
      _
    %160 = vsyncpa [#allocation3], 1
    %161 = vsyncpa [#allocation6], 1
    %162 = vsyncpa [#allocation4], 1

</llo_original>
